<compile_context>
chip_gen: v5e
topology: v5e:2x2
jax: 0.10.0
libtpu: 0.0.40
codegen_flags: <defaults>
</compile_context>

<pallas_src>
import functools

import jax
import jax.numpy as jnp
import numpy as np
from jax.experimental import pallas as pl
from jax.experimental.pallas import tpu as pltpu


def gprgnn_kernel(a_ref, x_ref, w1_ref, b1_ref, gamma_ref, w2_ref, b2_ref,
                  o_ref, *, K):
    # x = relu(lin1(x))            (dropout is identity in eval mode)
    # bf16 MXU operands, f32 accumulation.
    h = jnp.dot(x_ref[...], w1_ref[...], preferred_element_type=jnp.float32)
    h = jnp.maximum(h + b1_ref[...], 0.0)                       # f32 [N, H]

    # GPR propagation:
    #   hidden = gamma_0 * h;  x_{k+1} = A @ x_k;  hidden += gamma_{k+1} * x_{k+1}
    # hidden is accumulated in f32 on the VPU (co-issues in the slack of the
    # dependent A@x MXU chain); the state is carried in bf16 between steps.
    hidden = gamma_ref[0:1, :] * h                              # f32 [N, H]
    x_bf = h.astype(jnp.bfloat16)
    for k in range(K):                                          # small static K: keep unrolled
        x_f32 = jnp.dot(a_ref[...], x_bf,
                        preferred_element_type=jnp.float32)     # f32 [N, H]
        hidden = hidden + gamma_ref[k + 1:k + 2, :] * x_f32
        if k + 1 < K:
            x_bf = x_f32.astype(jnp.bfloat16)

    # x = lin2(hidden)             (trailing dropout is identity in eval mode)
    # Single wide matmul against the lane-padded W2; lane-dense (128) store.
    o_ref[...] = jnp.dot(hidden.astype(jnp.bfloat16), w2_ref[...],
                         preferred_element_type=jnp.float32) + b2_ref[...]


def prepare_params(A, W1, b1, W2, b2, temp):
    """One-time preprocessing (hoisted out of the per-call path).

    temp has torch layout [n_hidden, K+1] (GPR_propV2.temp).
    Returns kernel-ready operands: bf16 MXU inputs, lane-padded W2/b2, and the
    gamma table transposed to [K+1, n_hidden].
    """
    C = W2.shape[1]
    CPAD = ((C + 127) // 128) * 128                 # lane-dense output width
    A_bf = A.astype(jnp.bfloat16)
    W1_bf = W1.astype(jnp.bfloat16)
    W2_bf = jnp.pad(W2, ((0, 0), (0, CPAD - C))).astype(jnp.bfloat16)
    b2p = jnp.pad(b2, ((0, 0), (0, CPAD - C)))      # [1, CPAD] f32
    gamma = temp.T                                  # [K+1, H] f32
    return A_bf, W1_bf, b1, gamma, W2_bf, b2p, C, CPAD


def gprgnn_forward(A_bf, X, W1_bf, b1, gamma, W2_bf, b2p, K, C):
    """Forward pass. A/W1/W2/b2/gamma come pre-processed from prepare_params."""
    N, F_in = X.shape
    H = W1_bf.shape[1]
    CPAD = W2_bf.shape[1]
    X_bf = X.astype(jnp.bfloat16)

    # Advisory cost estimate (counts useful C lanes, not the CPAD padding).
    flops = (2 * N * F_in * H                       # lin1
             + K * 2 * N * N * H                    # K propagation steps (MXU)
             + (K + 1) * 2 * N * H                  # VPU hidden accumulation
             + 2 * N * H * C)                       # final lin2
    bytes_accessed = (2 * (A_bf.size + X_bf.size + W1_bf.size + W2_bf.size)
                      + 4 * (b1.size + gamma.size + b2p.size + N * CPAD))

    # Size scoped VMEM from the resident operands + output (defaults are only
    # 16/32 MiB while physical VMEM is 128/128/64 MiB across generations).
    resident_bytes = (2 * (A_bf.size + X_bf.size + W1_bf.size + W2_bf.size)
                      + 4 * (b1.size + gamma.size + b2p.size + N * CPAD))
    vmem_limit = int(min(100 * 1024 * 1024,
                         max(4 * 1024 * 1024, 2 * resident_bytes + (1 << 20))))

    vspec = pl.BlockSpec(memory_space=pltpu.MemorySpace.VMEM)
    out = pl.pallas_call(
        functools.partial(gprgnn_kernel, K=K),
        out_shape=jax.ShapeDtypeStruct((N, CPAD), jnp.float32),
        in_specs=[vspec] * 7,
        out_specs=vspec,
        compiler_params=pltpu.CompilerParams(vmem_limit_bytes=vmem_limit),
        cost_estimate=pl.CostEstimate(flops=flops, transcendentals=0,
                                      bytes_accessed=bytes_accessed),
    )(A_bf, X_bf, W1_bf, b1, gamma, W2_bf, b2p)
    return out[:, :C]


def reference_forward(A, X, W1, b1, W2, b2, temp, K):
    """Pure-JAX f32 reference matching the PyTorch module (eval mode)."""
    h = jax.nn.relu(X @ W1 + b1)
    hidden = h * temp[:, 0][None, :]
    x = h
    for k in range(K):
        x = A @ x
        hidden = hidden + temp[:, k + 1][None, :] * x
    return hidden @ W2 + b2


if __name__ == "__main__":
    # Small, forward-consistent shapes.
    N = 64            # number of graph nodes
    E = 256           # number of edges
    in_feats = 32
    n_hidden = 32
    n_classes = 8
    K = 4
    alpha = 0.1

    key = jax.random.PRNGKey(0)
    k_feat, k_src, k_dst, k_w1, k_b1, k_w2, k_b2 = jax.random.split(key, 7)

    # Node features.
    feature = jax.random.normal(k_feat, (N, in_feats), dtype=jnp.float32)

    # Deterministic synthetic graph: edge_index [2, E] with GCN-style symmetric
    # normalization for norm_A (how GPRGNN normally constructs it).
    src = jax.random.randint(k_src, (E,), 0, N)
    dst = jax.random.randint(k_dst, (E,), 0, N)
    deg_out = jnp.zeros((N,), jnp.float32).at[src].add(1.0) + 1.0
    deg_in = jnp.zeros((N,), jnp.float32).at[dst].add(1.0) + 1.0
    norm_A = 1.0 / jnp.sqrt(deg_in[dst] * deg_out[src])

    # Dense normalized adjacency (scatter-add matches aggr='add' with
    # message = norm * x_j, flow source_to_target).
    A = jnp.zeros((N, N), dtype=jnp.float32).at[dst, src].add(norm_A)

    # Deterministic parameter init (synthetic, not a checkpoint load).
    W1 = jax.random.normal(k_w1, (in_feats, n_hidden), dtype=jnp.float32) * 0.1
    b1 = jax.random.normal(k_b1, (1, n_hidden), dtype=jnp.float32) * 0.1
    W2 = jax.random.normal(k_w2, (n_hidden, n_classes), dtype=jnp.float32) * 0.1
    b2 = jax.random.normal(k_b2, (1, n_classes), dtype=jnp.float32) * 0.1

    # GPR temp parameter with torch layout [n_hidden, K+1].
    temp_np = alpha * (1.0 - alpha) ** np.arange(K + 1)
    temp_np[-1] = (1.0 - alpha) ** K
    temp = jnp.asarray(np.repeat(temp_np[None, :], n_hidden, axis=0),
                       dtype=jnp.float32)           # [n_hidden, K+1]

    # One-time parameter preparation (casts / pads / gamma transpose).
    A_bf, W1_bf, b1_p, gamma, W2_bf, b2p, C, CPAD = prepare_params(
        A, W1, b1, W2, b2, temp)

    out = gprgnn_forward(A_bf, feature, W1_bf, b1_p, gamma, W2_bf, b2p, K, C)
    out = jax.block_until_ready(out)

    ref = reference_forward(A, feature, W1, b1, W2, b2, temp, K)
    assert out.shape == (N, n_classes)
    # bf16 MXU operands (f32 accumulation, f32 gamma/hidden) -> slightly looser
    # tolerance vs the pure-f32 reference.
    assert jnp.allclose(out, ref, atol=3e-2, rtol=3e-2), "mismatch vs reference"

    print("KERNEL_OK")
</pallas_src>

<mosaic_0001>
module attributes {stable_mosaic.version = 11 : i64} {
  func.func @gprgnn_kernel(%arg0: memref<64x64xbf16, #tpu.memory_space<vmem>>, %arg1: memref<64x32xbf16, #tpu.memory_space<vmem>>, %arg2: memref<32x32xbf16, #tpu.memory_space<vmem>>, %arg3: memref<1x32xf32, #tpu.memory_space<vmem>>, %arg4: memref<5x32xf32, #tpu.memory_space<vmem>>, %arg5: memref<32x128xbf16, #tpu.memory_space<vmem>>, %arg6: memref<1x128xf32, #tpu.memory_space<vmem>>, %arg7: memref<64x128xf32, #tpu.memory_space<vmem>>) attributes {dimension_semantics = [], scalar_prefetch = 0 : i64, scratch_operands = 0 : i64, tpu.core_type = #tpu.core_type<tc>} {
    %c0 = arith.constant 0 : index
    %c0_0 = arith.constant 0 : index
    %0 = vector.load %arg1[%c0, %c0_0] : memref<64x32xbf16, #tpu.memory_space<vmem>>, vector<64x32xbf16>
    %c0_1 = arith.constant 0 : index
    %c0_2 = arith.constant 0 : index
    %1 = vector.load %arg2[%c0_1, %c0_2] : memref<32x32xbf16, #tpu.memory_space<vmem>>, vector<32x32xbf16>
    %cst = arith.constant dense<0.000000e+00> : vector<64x32xf32>
    %2 = tpu.matmul %0, %1, %cst {dimension_numbers = #tpu.dot_dimension_numbers<[1], [0], [0], [1], [0, 0, 1, 1], [], []>} : vector<64x32xbf16>, vector<32x32xbf16>, vector<64x32xf32> -> vector<64x32xf32>
    %c0_3 = arith.constant 0 : index
    %c0_4 = arith.constant 0 : index
    %3 = vector.load %arg3[%c0_3, %c0_4] : memref<1x32xf32, #tpu.memory_space<vmem>>, vector<1x32xf32>
    %4 = vector.broadcast %3 : vector<1x32xf32> to vector<64x32xf32>
    %5 = arith.addf %2, %4 : vector<64x32xf32>
    %cst_5 = arith.constant 0.000000e+00 : f32
    %6 = vector.broadcast %cst_5 : f32 to vector<64x32xf32>
    %7 = arith.maximumf %5, %6 : vector<64x32xf32>
    %c0_6 = arith.constant 0 : index
    %c0_7 = arith.constant 0 : index
    %8 = vector.load %arg4[%c0_6, %c0_7] : memref<5x32xf32, #tpu.memory_space<vmem>>, vector<1x32xf32>
    %9 = vector.broadcast %8 : vector<1x32xf32> to vector<64x32xf32>
    %10 = arith.mulf %9, %7 : vector<64x32xf32>
    %11 = arith.truncf %7 : vector<64x32xf32> to vector<64x32xbf16>
    %c0_8 = arith.constant 0 : index
    %c0_9 = arith.constant 0 : index
    %12 = vector.load %arg0[%c0_8, %c0_9] : memref<64x64xbf16, #tpu.memory_space<vmem>>, vector<64x64xbf16>
    %cst_10 = arith.constant dense<0.000000e+00> : vector<64x32xf32>
    %13 = tpu.matmul %12, %11, %cst_10 {dimension_numbers = #tpu.dot_dimension_numbers<[1], [0], [0], [1], [0, 0, 1, 1], [], []>} : vector<64x64xbf16>, vector<64x32xbf16>, vector<64x32xf32> -> vector<64x32xf32>
    %c1 = arith.constant 1 : index
    %c0_11 = arith.constant 0 : index
    %14 = vector.load %arg4[%c1, %c0_11] : memref<5x32xf32, #tpu.memory_space<vmem>>, vector<1x32xf32>
    %15 = vector.broadcast %14 : vector<1x32xf32> to vector<64x32xf32>
    %16 = arith.mulf %15, %13 : vector<64x32xf32>
    %17 = arith.addf %10, %16 : vector<64x32xf32>
    %18 = arith.truncf %13 : vector<64x32xf32> to vector<64x32xbf16>
    %c0_12 = arith.constant 0 : index
    %c0_13 = arith.constant 0 : index
    %19 = vector.load %arg0[%c0_12, %c0_13] : memref<64x64xbf16, #tpu.memory_space<vmem>>, vector<64x64xbf16>
    %cst_14 = arith.constant dense<0.000000e+00> : vector<64x32xf32>
    %20 = tpu.matmul %19, %18, %cst_14 {dimension_numbers = #tpu.dot_dimension_numbers<[1], [0], [0], [1], [0, 0, 1, 1], [], []>} : vector<64x64xbf16>, vector<64x32xbf16>, vector<64x32xf32> -> vector<64x32xf32>
    %c2 = arith.constant 2 : index
    %c0_15 = arith.constant 0 : index
    %21 = vector.load %arg4[%c2, %c0_15] : memref<5x32xf32, #tpu.memory_space<vmem>>, vector<1x32xf32>
    %22 = vector.broadcast %21 : vector<1x32xf32> to vector<64x32xf32>
    %23 = arith.mulf %22, %20 : vector<64x32xf32>
    %24 = arith.addf %17, %23 : vector<64x32xf32>
    %25 = arith.truncf %20 : vector<64x32xf32> to vector<64x32xbf16>
    %c0_16 = arith.constant 0 : index
    %c0_17 = arith.constant 0 : index
    %26 = vector.load %arg0[%c0_16, %c0_17] : memref<64x64xbf16, #tpu.memory_space<vmem>>, vector<64x64xbf16>
    %cst_18 = arith.constant dense<0.000000e+00> : vector<64x32xf32>
    %27 = tpu.matmul %26, %25, %cst_18 {dimension_numbers = #tpu.dot_dimension_numbers<[1], [0], [0], [1], [0, 0, 1, 1], [], []>} : vector<64x64xbf16>, vector<64x32xbf16>, vector<64x32xf32> -> vector<64x32xf32>
    %c3 = arith.constant 3 : index
    %c0_19 = arith.constant 0 : index
    %28 = vector.load %arg4[%c3, %c0_19] : memref<5x32xf32, #tpu.memory_space<vmem>>, vector<1x32xf32>
    %29 = vector.broadcast %28 : vector<1x32xf32> to vector<64x32xf32>
    %30 = arith.mulf %29, %27 : vector<64x32xf32>
    %31 = arith.addf %24, %30 : vector<64x32xf32>
    %32 = arith.truncf %27 : vector<64x32xf32> to vector<64x32xbf16>
    %c0_20 = arith.constant 0 : index
    %c0_21 = arith.constant 0 : index
    %33 = vector.load %arg0[%c0_20, %c0_21] : memref<64x64xbf16, #tpu.memory_space<vmem>>, vector<64x64xbf16>
    %cst_22 = arith.constant dense<0.000000e+00> : vector<64x32xf32>
    %34 = tpu.matmul %33, %32, %cst_22 {dimension_numbers = #tpu.dot_dimension_numbers<[1], [0], [0], [1], [0, 0, 1, 1], [], []>} : vector<64x64xbf16>, vector<64x32xbf16>, vector<64x32xf32> -> vector<64x32xf32>
    %c4 = arith.constant 4 : index
    %c0_23 = arith.constant 0 : index
    %35 = vector.load %arg4[%c4, %c0_23] : memref<5x32xf32, #tpu.memory_space<vmem>>, vector<1x32xf32>
    %36 = vector.broadcast %35 : vector<1x32xf32> to vector<64x32xf32>
    %37 = arith.mulf %36, %34 : vector<64x32xf32>
    %38 = arith.addf %31, %37 : vector<64x32xf32>
    %39 = arith.truncf %38 : vector<64x32xf32> to vector<64x32xbf16>
    %c0_24 = arith.constant 0 : index
    %c0_25 = arith.constant 0 : index
    %40 = vector.load %arg5[%c0_24, %c0_25] : memref<32x128xbf16, #tpu.memory_space<vmem>>, vector<32x128xbf16>
    %cst_26 = arith.constant dense<0.000000e+00> : vector<64x128xf32>
    %41 = tpu.matmul %39, %40, %cst_26 {dimension_numbers = #tpu.dot_dimension_numbers<[1], [0], [0], [1], [0, 0, 1, 1], [], []>} : vector<64x32xbf16>, vector<32x128xbf16>, vector<64x128xf32> -> vector<64x128xf32>
    %c0_27 = arith.constant 0 : index
    %c0_28 = arith.constant 0 : index
    %42 = vector.load %arg6[%c0_27, %c0_28] : memref<1x128xf32, #tpu.memory_space<vmem>>, vector<1x128xf32>
    %43 = vector.broadcast %42 : vector<1x128xf32> to vector<64x128xf32>
    %44 = arith.addf %41, %43 : vector<64x128xf32>
    %c0_29 = arith.constant 0 : index
    %c0_30 = arith.constant 0 : index
    %45 = vector.load %arg7[%c0_29, %c0_30] : memref<64x128xf32, #tpu.memory_space<vmem>>, vector<64x128xf32>
    tpu.vector_store %arg7[%c0_29, %c0_30], %44 {strides = array<i32>} : memref<64x128xf32, #tpu.memory_space<vmem>>, vector<64x128xf32>,
    return
  }
}

</mosaic_0001>

<llo_original>
// kernel: tpu_custom_call.1
$region0: #{tpu_custom_call.1}
  #allocation0 [shape = 'u32[]', space=smem, size = 0x4, offset = 0x4, fixed_abs, tag = 'smem constant byte address 0x4 - core index']
  #allocation1 [shape = 'u32[72,128]{1,0:T(1,128)}', space=vmem, size = 0x9000, scoped, tag = 'internal scratch']
  %s0 = inlined_call_operand.vmem [shape: bf16[64,64], index: 0, kind: input, shape index: {}]
  %s1 = inlined_call_operand.vmem [shape: bf16[64,32], index: 1, kind: input, shape index: {}]
  %s2 = inlined_call_operand.vmem [shape: bf16[32,32], index: 2, kind: input, shape index: {}]
  %s3 = inlined_call_operand.vmem [shape: f32[1,32], index: 3, kind: input, shape index: {}]
  %s4 = inlined_call_operand.hbm [shape: f32[5,32], index: 4, kind: input, shape index: {}]
  %s5 = inlined_call_operand.hbm [shape: bf16[32,128], index: 5, kind: input, shape index: {}]
  %s6 = inlined_call_operand.vmem [shape: f32[1,128], index: 6, kind: input, shape index: {}]
  %s7 = inlined_call_operand.hbm [shape: f32[64,128], index: 7, kind: output, shape index: {}]
  %s8 = sld [smem:[#allocation0]]
  $region46: #{tpu_custom_call.1} parent=0
    _
  %s10 = ssub.s32 1, %s8
  %s11 = scalar_select 0, %s10, %s8
  $region1: #{tpu_custom_call.1} parent=0
    #allocation2 [shape = 'u8[4096]{0}', space=vmem, size = 0x1000, scoped, tag = 'input window, operand 4, single buffered']
    #allocation3 [shape = 's32[1]{0}', space=sflag, size = 0x4, scoped, tag = 'scoped memory for tpu_custom_call.1']
    #allocation4 [shape = 's32[1]{0}', space=sflag, size = 0x4, scoped, tag = 'scoped memory for tpu_custom_call.1']
    #allocation5 [shape = 'u8[8192]{0}', space=vmem, size = 0x2000, scoped, tag = 'input window, operand 5, single buffered']
    #allocation6 [shape = 's32[1]{0}', space=sflag, size = 0x4, scoped, tag = 'scoped memory for tpu_custom_call.1']
    #allocation7 [shape = 'u8[32768]{0}', space=vmem, size = 0x8000, scoped, tag = 'output window, operand 0, single buffered']
    %12 = vsyncpa [#allocation3], 0
    %13 = vsyncpa [#allocation6], 0
    %14 = vsyncpa [#allocation4], 0
    // Predicated region
    $region2: #{tpu_custom_call.1} parent=1 // pred_check
      _
    $region3: #{tpu_custom_call.1} parent=1 // pred_check_branch
      %16 = sbr.rel (0) target = $region5
    $region4: #{tpu_custom_call.1} parent=1 // pred_region
      _
    $region5: #{tpu_custom_call.1} parent=1 // pred_fallthru
      _
    // Predicated region
    $region6: #{tpu_custom_call.1} parent=1 // pred_check
      _
    $region7: #{tpu_custom_call.1} parent=1 // pred_check_branch
      %18 = sbr.rel (0) target = $region9
    $region8: #{tpu_custom_call.1} parent=1 // pred_region
      _
    $region9: #{tpu_custom_call.1} parent=1 // pred_fallthru
      _
    // Predicated region
    $region10: #{tpu_custom_call.1} parent=1 // pred_check
      _
    $region11: #{tpu_custom_call.1} parent=1 // pred_check_branch
      %20 = sbr.rel (0) target = $region13
    $region12: #{tpu_custom_call.1} parent=1 // pred_region
      _
    $region13: #{tpu_custom_call.1} parent=1 // pred_fallthru
      _
    // Predicated region
    $region14: #{tpu_custom_call.1} parent=1 // pred_check
      _
    $region15: #{tpu_custom_call.1} parent=1 // pred_check_branch
      %22 = sbr.rel (0) target = $region17
    $region16: #{tpu_custom_call.1} parent=1 // pred_region
      _
    $region17: #{tpu_custom_call.1} parent=1 // pred_fallthru
      _
    // Predicated region
    $region18: #{tpu_custom_call.1} parent=1 // pred_check
      _
    $region19: #{tpu_custom_call.1} parent=1 // pred_check_branch
      %24 = sbr.rel (0) target = $region21
    $region20: #{tpu_custom_call.1} parent=1 // pred_region
      %26 = vsyncadd [#allocation3], 0
      %s28 = sshll.u32 %s4, 4
      %s29 = int_to_ptr.hbm [resolvable:$true] %s28
      %s30 = sshll.u32 [#allocation2], 4
      %s31 = int_to_ptr.vmem [resolvable:$true] %s30
      %33 = dma.hbm_to_vmem [thread:$0]  %s29, 128, %s31, [#allocation3]
    $region21: #{tpu_custom_call.1} parent=1 // pred_fallthru
      _
    // Predicated region
    $region22: #{tpu_custom_call.1} parent=1 // pred_check
      _
    $region23: #{tpu_custom_call.1} parent=1 // pred_check_branch
      %35 = sbr.rel (0) target = $region25
    $region24: #{tpu_custom_call.1} parent=1 // pred_region
      %37 = vsyncadd [#allocation6], 0
      %s38 = sshll.u32 %s5, 4
      %s39 = int_to_ptr.hbm [resolvable:$true] %s38
      %s40 = sshll.u32 [#allocation5], 4
      %s41 = int_to_ptr.vmem [resolvable:$true] %s40
      %46 = dma.hbm_to_vmem [thread:$0]  %s39, 256, %s41, [#allocation6], 64, 64, 4
    $region25: #{tpu_custom_call.1} parent=1 // pred_fallthru
      _
    // Predicated region
    $region26: #{tpu_custom_call.1} parent=1 // pred_check
      _
    $region27: #{tpu_custom_call.1} parent=1 // pred_check_branch
      %48 = sbr.rel (0) target = $region29
    $region28: #{tpu_custom_call.1} parent=1 // pred_region
      _
    $region29: #{tpu_custom_call.1} parent=1 // pred_fallthru
      _
    // Predicated region
    $region30: #{tpu_custom_call.1} parent=1 // pred_check
      _
    $region31: #{tpu_custom_call.1} parent=1 // pred_check_branch
      %50 = sbr.rel (0) target = $region33
    $region32: #{tpu_custom_call.1} parent=1 // pred_region
      %52 = dma.done [#allocation3], 128
    $region33: #{tpu_custom_call.1} parent=1 // pred_fallthru
      _
    // Predicated region
    $region34: #{tpu_custom_call.1} parent=1 // pred_check
      _
    $region35: #{tpu_custom_call.1} parent=1 // pred_check_branch
      %54 = sbr.rel (0) target = $region37
    $region36: #{tpu_custom_call.1} parent=1 // pred_region
      %56 = dma.done [#allocation6], 256
    $region37: #{tpu_custom_call.1} parent=1 // pred_fallthru
      _
    %v58 = vld [vmem:[%s1] sm:$0xf]
    %v59 = vld [vmem:[%s1 + $0x4] sm:$0xf]
    %v60 = vld [vmem:[%s1 + $0x8] sm:$0xf]
    %v61 = vld [vmem:[%s1 + $0xc] sm:$0xf]
    %v62 = vld [vmem:[%s1 + $0x10] sm:$0xf]
    %v63 = vld [vmem:[%s1 + $0x14] sm:$0xf]
    %v64 = vld [vmem:[%s1 + $0x18] sm:$0xf]
    %v65 = vld [vmem:[%s1 + $0x1c] sm:$0xf]
    %v66 = vld [vmem:[%s2] sm:$0xf]
    %v67 = vld [vmem:[%s2 + $0x4] sm:$0xf]
    %v68 = vld [vmem:[%s2 + $0x8] sm:$0xf]
    %v69 = vld [vmem:[%s2 + $0xc] sm:$0xf]
    %v70 = vld [vmem:[%s3] sm:$0x1]
    %v72 = vperm.slane %v70, 0
    %v82 = vunpack.c.l.b16 %v58
    %v83 = vunpack.c.l.b16 %v59
    %v84 = vunpack.c.l.b16 %v60
    %v85 = vunpack.c.l.b16 %v61
    %v86 = vunpack.c.l.b16 %v62
    %v87 = vunpack.c.l.b16 %v63
    %v88 = vunpack.c.l.b16 %v64
    %v89 = vunpack.c.l.b16 %v65
    %v90 = vpack.c.b16 %v83, %v82
    %v91 = vpack.c.b16 %v85, %v84
    %v92 = vpack.c.b16 %v87, %v86
    %v93 = vpack.c.b16 %v89, %v88
    %v98 = vunpack.c.l.b16 %v66
    %v99 = vunpack.c.l.b16 %v67
    %v100 = vunpack.c.l.b16 %v68
    %v101 = vunpack.c.l.b16 %v69
    %v102 = vpack.c.b16 %v99, %v98
    %v103 = vpack.c.b16 %v101, %v100
    %vm106 = vcmask 261120
    %v108 = vsel %vm106, %v90, 0
    %v111 = vsel %vm106, %v91, 0
    %v114 = vsel %vm106, %v92, 0
    %v117 = vsel %vm106, %v93, 0
    %119 = vmatpush.bf16.msra.mxu0 0
    %120 = vmatpush.bf16.msra.mxu0 0
    %121 = vmatpush.bf16.msra.mxu0 0
    %122 = vmatpush.bf16.msra.mxu0 0
    %123 = vmatpush.bf16.msra.mxu0 0
    %124 = vmatpush.bf16.msra.mxu0 0
    %125 = vmatpush.bf16.msra.mxu0 %v103
    %126 = vmatpush.bf16.msra.mxu0 %v102
    %127 = vmatmul.bf16.gmra.mxu0 %v108
    %v128 = vpop.f32.mrf.mxu0
    %v129 = vadd.f32 %v72, %v128
    %v130 = vpop.f32.mrf.mxu0
    %v131 = vadd.f32 %v72, %v130
    %132 = vmatmul.bf16.gmra.mxu0 %v111
    %v133 = vpop.f32.mrf.mxu0
    %v134 = vadd.f32 %v72, %v133
    %v135 = vpop.f32.mrf.mxu0
    %v136 = vadd.f32 %v72, %v135
    %137 = vmatmul.bf16.gmra.mxu0 %v114
    %v138 = vpop.f32.mrf.mxu0
    %v139 = vadd.f32 %v72, %v138
    %v140 = vpop.f32.mrf.mxu0
    %v141 = vadd.f32 %v72, %v140
    %142 = vmatmul.bf16.gmra.mxu0 %v117
    %v143 = vpop.f32.mrf.mxu0
    %v144 = vadd.f32 %v72, %v143
    %v145 = vpop.f32.mrf.mxu0
    %v146 = vadd.f32 %v72, %v145
    %147 = vdwg.mxu0
    %v148 = vmax.f32 %v129, 0.0
    %v149 = vmax.f32 %v131, 0.0
    %v150 = vmax.f32 %v134, 0.0
    %v151 = vmax.f32 %v136, 0.0
    %v152 = vmax.f32 %v139, 0.0
    %v153 = vmax.f32 %v141, 0.0
    %v154 = vmax.f32 %v144, 0.0
    %v155 = vmax.f32 %v146, 0.0
    %v156 = vld [vmem:[#allocation2] sm:$0x1]
    %v157 = vperm.slane %v156, 0
    %v158 = vmul.f32 %v157, %v148
    %v159 = vmul.f32 %v157, %v149
    %v160 = vmul.f32 %v157, %v150
    %v161 = vmul.f32 %v157, %v151
    %v162 = vmul.f32 %v157, %v152
    %v163 = vmul.f32 %v157, %v153
    %v164 = vmul.f32 %v157, %v154
    %v165 = vmul.f32 %v157, %v155
    %v166 = vpack.c.bf16 %v149, %v148
    %v167 = vpack.c.bf16 %v151, %v150
    %v168 = vpack.c.bf16 %v153, %v152
    %v169 = vpack.c.bf16 %v155, %v154
    %v170 = vld [vmem:[%s0] sm:$0xf]
    %v171 = vld [vmem:[%s0 + $0x4] sm:$0xf]
    %v172 = vld [vmem:[%s0 + $0x8] sm:$0xf]
    %v173 = vld [vmem:[%s0 + $0xc] sm:$0xf]
    %v174 = vld [vmem:[%s0 + $0x10] sm:$0xf]
    %v175 = vld [vmem:[%s0 + $0x14] sm:$0xf]
    %v176 = vld [vmem:[%s0 + $0x18] sm:$0xf]
    %v177 = vld [vmem:[%s0 + $0x1c] sm:$0xf]
    %v186 = vunpack.c.l.b16 %v170
    %v187 = vunpack.c.l.b16 %v171
    %v188 = vunpack.c.l.b16 %v172
    %v189 = vunpack.c.l.b16 %v173
    %v190 = vunpack.c.l.b16 %v174
    %v191 = vunpack.c.l.b16 %v175
    %v192 = vunpack.c.l.b16 %v176
    %v193 = vunpack.c.l.b16 %v177
    %v194 = vpack.c.b16 %v187, %v186
    %v195 = vpack.c.b16 %v189, %v188
    %v196 = vpack.c.b16 %v191, %v190
    %v197 = vpack.c.b16 %v193, %v192
    %vm198 = vcmask 523264
    %v200 = vsel %vm198, %v194, 0
    %v203 = vsel %vm198, %v195, 0
    %v206 = vsel %vm198, %v196, 0
    %v209 = vsel %vm198, %v197, 0
    %211 = vmatpush.bf16.msra.mxu0 0
    %212 = vmatpush.bf16.msra.mxu0 0
    %213 = vmatpush.bf16.msra.mxu0 0
    %214 = vmatpush.bf16.msra.mxu0 0
    %215 = vmatpush.bf16.msra.mxu0 %v169
    %216 = vmatpush.bf16.msra.mxu0 %v168
    %217 = vmatpush.bf16.msra.mxu0 %v167
    %218 = vmatpush.bf16.msra.mxu0 %v166
    %219 = vmatmul.bf16.gmra.mxu0 %v200
    %v220 = vpop.f32.mrf.mxu0
    %v221 = vadd.f32 0.0, %v220
    %v222 = vpop.f32.mrf.mxu0
    %v223 = vadd.f32 0.0, %v222
    %224 = vmatmul.bf16.gmra.mxu0 %v203
    %v225 = vpop.f32.mrf.mxu0
    %v226 = vadd.f32 0.0, %v225
    %v227 = vpop.f32.mrf.mxu0
    %v228 = vadd.f32 0.0, %v227
    %229 = vmatmul.bf16.gmra.mxu0 %v206
    %v230 = vpop.f32.mrf.mxu0
    %v231 = vadd.f32 0.0, %v230
    %v232 = vpop.f32.mrf.mxu0
    %v233 = vadd.f32 0.0, %v232
    %234 = vmatmul.bf16.gmra.mxu0 %v209
    %v235 = vpop.f32.mrf.mxu0
    %v236 = vadd.f32 0.0, %v235
    %v237 = vpop.f32.mrf.mxu0
    %v238 = vadd.f32 0.0, %v237
    %239 = vdwg.mxu0
    %v240 = vld [vmem:[#allocation2 + $0x1] sm:$0x1]
    %v241 = vperm.slane %v240, 0
    %v242 = vmul.f32 %v241, %v221
    %v243 = vmul.f32 %v241, %v223
    %v244 = vmul.f32 %v241, %v226
    %v245 = vmul.f32 %v241, %v228
    %v246 = vmul.f32 %v241, %v231
    %v247 = vmul.f32 %v241, %v233
    %v248 = vmul.f32 %v241, %v236
    %v249 = vmul.f32 %v241, %v238
    %v250 = vadd.f32 %v158, %v242
    %v251 = vadd.f32 %v159, %v243
    %v252 = vadd.f32 %v160, %v244
    %v253 = vadd.f32 %v161, %v245
    %v254 = vadd.f32 %v162, %v246
    %v255 = vadd.f32 %v163, %v247
    %v256 = vadd.f32 %v164, %v248
    %v257 = vadd.f32 %v165, %v249
    %v258 = vpack.c.bf16 %v223, %v221
    %v259 = vpack.c.bf16 %v228, %v226
    %v260 = vpack.c.bf16 %v233, %v231
    %v261 = vpack.c.bf16 %v238, %v236
    %262 = vmatpush.bf16.msra.mxu0 0
    %263 = vmatpush.bf16.msra.mxu0 0
    %264 = vmatpush.bf16.msra.mxu0 0
    %265 = vmatpush.bf16.msra.mxu0 0
    %266 = vmatpush.bf16.msra.mxu0 %v261
    %267 = vmatpush.bf16.msra.mxu0 %v260
    %268 = vmatpush.bf16.msra.mxu0 %v259
    %269 = vmatpush.bf16.msra.mxu0 %v258
    %270 = vmatmul.bf16.gmra.mxu0 %v200
    %v271 = vpop.f32.mrf.mxu0
    %v272 = vadd.f32 0.0, %v271
    %v273 = vpop.f32.mrf.mxu0
    %v274 = vadd.f32 0.0, %v273
    %275 = vmatmul.bf16.gmra.mxu0 %v203
    %v276 = vpop.f32.mrf.mxu0
    %v277 = vadd.f32 0.0, %v276
    %v278 = vpop.f32.mrf.mxu0
    %v279 = vadd.f32 0.0, %v278
    %280 = vmatmul.bf16.gmra.mxu0 %v206
    %v281 = vpop.f32.mrf.mxu0
    %v282 = vadd.f32 0.0, %v281
    %v283 = vpop.f32.mrf.mxu0
    %v284 = vadd.f32 0.0, %v283
    %285 = vmatmul.bf16.gmra.mxu0 %v209
    %v286 = vpop.f32.mrf.mxu0
    %v287 = vadd.f32 0.0, %v286
    %v288 = vpop.f32.mrf.mxu0
    %v289 = vadd.f32 0.0, %v288
    %290 = vdwg.mxu0
    %v291 = vld [vmem:[#allocation2 + $0x2] sm:$0x1]
    %v292 = vperm.slane %v291, 0
    %v293 = vmul.f32 %v292, %v272
    %v294 = vmul.f32 %v292, %v274
    %v295 = vmul.f32 %v292, %v277
    %v296 = vmul.f32 %v292, %v279
    %v297 = vmul.f32 %v292, %v282
    %v298 = vmul.f32 %v292, %v284
    %v299 = vmul.f32 %v292, %v287
    %v300 = vmul.f32 %v292, %v289
    %v301 = vadd.f32 %v250, %v293
    %v302 = vadd.f32 %v251, %v294
    %v303 = vadd.f32 %v252, %v295
    %v304 = vadd.f32 %v253, %v296
    %v305 = vadd.f32 %v254, %v297
    %v306 = vadd.f32 %v255, %v298
    %v307 = vadd.f32 %v256, %v299
    %v308 = vadd.f32 %v257, %v300
    %v309 = vpack.c.bf16 %v274, %v272
    %v310 = vpack.c.bf16 %v279, %v277
    %v311 = vpack.c.bf16 %v284, %v282
    %v312 = vpack.c.bf16 %v289, %v287
    %313 = vmatpush.bf16.msra.mxu0 0
    %314 = vmatpush.bf16.msra.mxu0 0
    %315 = vmatpush.bf16.msra.mxu0 0
    %316 = vmatpush.bf16.msra.mxu0 0
    %317 = vmatpush.bf16.msra.mxu0 %v312
    %318 = vmatpush.bf16.msra.mxu0 %v311
    %319 = vmatpush.bf16.msra.mxu0 %v310
    %320 = vmatpush.bf16.msra.mxu0 %v309
    %321 = vmatmul.bf16.gmra.mxu0 %v200
    %v322 = vpop.f32.mrf.mxu0
    %v323 = vadd.f32 0.0, %v322
    %v324 = vpop.f32.mrf.mxu0
    %v325 = vadd.f32 0.0, %v324
    %326 = vmatmul.bf16.gmra.mxu0 %v203
    %v327 = vpop.f32.mrf.mxu0
    %v328 = vadd.f32 0.0, %v327
    %v329 = vpop.f32.mrf.mxu0
    %v330 = vadd.f32 0.0, %v329
    %331 = vmatmul.bf16.gmra.mxu0 %v206
    %v332 = vpop.f32.mrf.mxu0
    %v333 = vadd.f32 0.0, %v332
    %v334 = vpop.f32.mrf.mxu0
    %v335 = vadd.f32 0.0, %v334
    %336 = vmatmul.bf16.gmra.mxu0 %v209
    %v337 = vpop.f32.mrf.mxu0
    %v338 = vadd.f32 0.0, %v337
    %v339 = vpop.f32.mrf.mxu0
    %v340 = vadd.f32 0.0, %v339
    %341 = vdwg.mxu0
    %v342 = vld [vmem:[#allocation2 + $0x3] sm:$0x1]
    %v343 = vperm.slane %v342, 0
    %v344 = vmul.f32 %v343, %v323
    %v345 = vmul.f32 %v343, %v325
    %v346 = vmul.f32 %v343, %v328
    %v347 = vmul.f32 %v343, %v330
    %v348 = vmul.f32 %v343, %v333
    %v349 = vmul.f32 %v343, %v335
    %v350 = vmul.f32 %v343, %v338
    %v351 = vmul.f32 %v343, %v340
    %v352 = vadd.f32 %v301, %v344
    %v353 = vadd.f32 %v302, %v345
    %v354 = vadd.f32 %v303, %v346
    %v355 = vadd.f32 %v304, %v347
    %v356 = vadd.f32 %v305, %v348
    %v357 = vadd.f32 %v306, %v349
    %v358 = vadd.f32 %v307, %v350
    %v359 = vadd.f32 %v308, %v351
    %v360 = vpack.c.bf16 %v325, %v323
    %v361 = vpack.c.bf16 %v330, %v328
    %v362 = vpack.c.bf16 %v335, %v333
    %v363 = vpack.c.bf16 %v340, %v338
    %364 = vmatpush.bf16.msra.mxu0 0
    %365 = vmatpush.bf16.msra.mxu0 0
    %366 = vmatpush.bf16.msra.mxu0 0
    %367 = vmatpush.bf16.msra.mxu0 0
    %368 = vmatpush.bf16.msra.mxu0 %v363
    %369 = vmatpush.bf16.msra.mxu0 %v362
    %370 = vmatpush.bf16.msra.mxu0 %v361
    %371 = vmatpush.bf16.msra.mxu0 %v360
    %372 = vmatmul.bf16.gmra.mxu0 %v200
    %v373 = vpop.f32.mrf.mxu0
    %v374 = vadd.f32 0.0, %v373
    %v375 = vpop.f32.mrf.mxu0
    %v376 = vadd.f32 0.0, %v375
    %377 = vmatmul.bf16.gmra.mxu0 %v203
    %v378 = vpop.f32.mrf.mxu0
    %v379 = vadd.f32 0.0, %v378
    %v380 = vpop.f32.mrf.mxu0
    %v381 = vadd.f32 0.0, %v380
    %382 = vmatmul.bf16.gmra.mxu0 %v206
    %v383 = vpop.f32.mrf.mxu0
    %v384 = vadd.f32 0.0, %v383
    %v385 = vpop.f32.mrf.mxu0
    %v386 = vadd.f32 0.0, %v385
    %387 = vmatmul.bf16.gmra.mxu0 %v209
    %v388 = vpop.f32.mrf.mxu0
    %v389 = vadd.f32 0.0, %v388
    %v390 = vpop.f32.mrf.mxu0
    %v391 = vadd.f32 0.0, %v390
    %392 = vdwg.mxu0
    %v393 = vld [vmem:[#allocation2 + $0x4] sm:$0x1]
    %v394 = vperm.slane %v393, 0
    %v395 = vmul.f32 %v394, %v374
    %v396 = vmul.f32 %v394, %v376
    %v397 = vmul.f32 %v394, %v379
    %v398 = vmul.f32 %v394, %v381
    %v399 = vmul.f32 %v394, %v384
    %v400 = vmul.f32 %v394, %v386
    %v401 = vmul.f32 %v394, %v389
    %v402 = vmul.f32 %v394, %v391
    %v403 = vadd.f32 %v352, %v395
    %v404 = vadd.f32 %v353, %v396
    %v405 = vadd.f32 %v354, %v397
    %v406 = vadd.f32 %v355, %v398
    %v407 = vadd.f32 %v356, %v399
    %v408 = vadd.f32 %v357, %v400
    %v409 = vadd.f32 %v358, %v401
    %v410 = vadd.f32 %v359, %v402
    %v411 = vpack.c.bf16 %v404, %v403
    %v412 = vpack.c.bf16 %v406, %v405
    %v413 = vpack.c.bf16 %v408, %v407
    %v414 = vpack.c.bf16 %v410, %v409
    %v415 = vld [vmem:[#allocation5] sm:$0xf]
    %v416 = vld [vmem:[#allocation5 + $0x4] sm:$0xf]
    %v417 = vld [vmem:[#allocation5 + $0x8] sm:$0xf]
    %v418 = vld [vmem:[#allocation5 + $0xc] sm:$0xf]
    %v419 = vld [vmem:[%s6] sm:$0x1]
    %v421 = vperm.slane %v419, 0
    %v427 = vunpack.c.l.b16 %v415
    %v428 = vunpack.c.l.b16 %v416
    %v429 = vunpack.c.l.b16 %v417
    %v430 = vunpack.c.l.b16 %v418
    %v431 = vpack.c.b16 %v428, %v427
    %v432 = vpack.c.b16 %v430, %v429
    %v436 = vsel %vm106, %v411, 0
    %v439 = vsel %vm106, %v412, 0
    %v442 = vsel %vm106, %v413, 0
    %v445 = vsel %vm106, %v414, 0
    %447 = vmatpush.bf16.msra.mxu0 0
    %448 = vmatpush.bf16.msra.mxu0 0
    %449 = vmatpush.bf16.msra.mxu0 0
    %450 = vmatpush.bf16.msra.mxu0 0
    %451 = vmatpush.bf16.msra.mxu0 0
    %452 = vmatpush.bf16.msra.mxu0 0
    %453 = vmatpush.bf16.msra.mxu0 %v432
    %454 = vmatpush.bf16.msra.mxu0 %v431
    %455 = vmatmul.bf16.gmra.mxu0 %v436
    %v456 = vpop.f32.mrf.mxu0
    %v457 = vadd.f32 %v421, %v456
    %v458 = vpop.f32.mrf.mxu0
    %v459 = vadd.f32 %v421, %v458
    %460 = vmatmul.bf16.gmra.mxu0 %v439
    %v461 = vpop.f32.mrf.mxu0
    %v462 = vadd.f32 %v421, %v461
    %v463 = vpop.f32.mrf.mxu0
    %v464 = vadd.f32 %v421, %v463
    %465 = vmatmul.bf16.gmra.mxu0 %v442
    %v466 = vpop.f32.mrf.mxu0
    %v467 = vadd.f32 %v421, %v466
    %v468 = vpop.f32.mrf.mxu0
    %v469 = vadd.f32 %v421, %v468
    %470 = vmatmul.bf16.gmra.mxu0 %v445
    %v471 = vpop.f32.mrf.mxu0
    %v472 = vadd.f32 %v421, %v471
    %v473 = vpop.f32.mrf.mxu0
    %v474 = vadd.f32 %v421, %v473
    %475 = vdwg.mxu0
    %476 = vst [vmem:[#allocation7] sm:$0xff] %v457
    %477 = vst [vmem:[#allocation7 + $0x8] sm:$0xff] %v459
    %478 = vst [vmem:[#allocation7 + $0x10] sm:$0xff] %v462
    %479 = vst [vmem:[#allocation7 + $0x18] sm:$0xff] %v464
    %480 = vst [vmem:[#allocation7 + $0x20] sm:$0xff] %v467
    %481 = vst [vmem:[#allocation7 + $0x28] sm:$0xff] %v469
    %482 = vst [vmem:[#allocation7 + $0x30] sm:$0xff] %v472
    %483 = vst [vmem:[#allocation7 + $0x38] sm:$0xff] %v474
    // Predicated region
    $region38: #{tpu_custom_call.1} parent=1 // pred_check
      _
    $region39: #{tpu_custom_call.1} parent=1 // pred_check_branch
      %485 = sbr.rel (0) target = $region41
    $region40: #{tpu_custom_call.1} parent=1 // pred_region
      %487 = vsyncadd [#allocation4], 0
      %s488 = sshll.u32 [#allocation7], 4
      %s489 = int_to_ptr.vmem [resolvable:$true] %s488
      %s490 = sshll.u32 %s7, 4
      %s491 = int_to_ptr.hbm [resolvable:$true] %s490
      %496 = dma.vmem_to_hbm [thread:$0]  %s489, 1024, %s491, [#allocation4], 128, 128, 8
    $region41: #{tpu_custom_call.1} parent=1 // pred_fallthru
      _
    // Predicated region
    $region42: #{tpu_custom_call.1} parent=1 // pred_check
      _
    $region43: #{tpu_custom_call.1} parent=1 // pred_check_branch
      %498 = sbr.rel (0) target = $region45
    $region44: #{tpu_custom_call.1} parent=1 // pred_region
      %500 = dma.done [#allocation4], 1024
    $region45: #{tpu_custom_call.1} parent=1 // pred_fallthru
      _
    %501 = vsyncpa [#allocation3], 1
    %502 = vsyncpa [#allocation6], 1
    %503 = vsyncpa [#allocation4], 1

</llo_original>
